<compile_context>
chip_gen: v7x
topology: tpu7x:2x2x1
jax: 0.10.0
libtpu: 0.0.40
codegen_flags: <defaults>
</compile_context>

<pallas_src>
import functools
import math

import jax
import jax.numpy as jnp
from jax.experimental import pallas as pl
from jax.experimental.pallas import tpu as pltpu

KH = KW = 3          # 3x3 first conv, padding=1
_PADL = 8            # zero lanes at both ends of the flattened strip (corner-tap bounds)


def _cdiv(a, b):
    return -(-a // b)


def _round_up(a, b):
    return _cdiv(a, b) * b


def _localizer_kernel(x_ref, halo_ref, w1_ref, aux_ref, b2_ref,
                      out_ref, patch_ref, *,
                      n_chan, width, tile_rows, kc, compute_dtype):
    """One (batch, row-tile) grid step.

    x_ref:     (C, TH*W)      f32  flattened row-tile of the raw image
    halo_ref:  (2, C, W)      f32  image row just above [0] / below [1] the tile
                                   (zeros at the top/bottom image edges)
    w1_ref:    (hidden, KCp)  cdt  first-conv weight, transposed, K zero-padded
    aux_ref:   (hidden, 2)    f32  col 0 = b1, col 1 = w2 (1x1 second conv)
    b2_ref:    (1, 1)         f32  SMEM scalar (second-conv bias)
    out_ref:   (1, TH*W)      f32  lane-dense output block
    patch_ref: (KCp, TH*W)    cdt  VMEM scratch: transposed im2col patch matrix
    """
    C, W = n_chan, width
    tpix = tile_rows * W
    cdt = compute_dtype
    kc_pad = patch_ref.shape[0]

    # Early cast to the MXU compute dtype: halves the tap-build copy traffic.
    core = x_ref[...].astype(cdt)                        # (C, TH*W)
    top = halo_ref[0].astype(cdt)                        # (C, W)
    bot = halo_ref[1].astype(cdt)                        # (C, W)
    zpad = jnp.zeros((C, _PADL), cdt)

    # Flattened working strip: [zeros | row above | TH rows | row below | zeros].
    # In this flat layout a (ky, kx) conv tap is a constant lane shift of
    # ky*W + (kx-1); only column-edge wraparound needs masking (== conv zero pad).
    xt = jnp.concatenate([zpad, top, core, bot, zpad], axis=1)

    col = jax.lax.broadcasted_iota(jnp.int32, (1, tpix), 1) % W
    left_edge = col == 0
    right_edge = col == (W - 1)
    zero = jnp.array(0, dtype=cdt)

    # Build the transposed im2col matrix (taps on sublanes, pixels on lanes)
    # directly into the VMEM scratch: no concat pass, no separate cast pass.
    for ky in range(KH):
        for kx in range(KW):
            start = _PADL + ky * W + (kx - 1)            # static, always in bounds
            tap = xt[:, start:start + tpix]              # (C, TH*W)
            if kx == 0:
                tap = jnp.where(left_edge, zero, tap)
            elif kx == KW - 1:
                tap = jnp.where(right_edge, zero, tap)
            r = (ky * KW + kx) * C
            patch_ref[r:r + C, :] = tap                  # direct sublane-range store

    # Zero the KC -> KC_pad padding rows: w1's padded K columns are zero, but
    # 0 * stale-NaN from uninitialized VMEM would still poison the accumulation.
    if kc_pad > kc:
        patch_ref[kc:, :] = jnp.zeros((kc_pad - kc, tpix), cdt)

    # First conv: one MXU matmul with f32 accumulation; pixels stay on lanes.
    h = jnp.dot(w1_ref[...], patch_ref[...],
                preferred_element_type=jnp.float32)      # (hidden, TH*W)
    b1 = aux_ref[:, 0:1]                                 # (hidden, 1) f32
    w2 = aux_ref[:, 1:2]                                 # (hidden, 1) f32
    h = jnp.maximum(h + b1, 0.0)                         # bias + ReLU (f32, VPU)

    # 1x1 second conv: VPU multiply + reduce over the (small) hidden sublanes.
    o = jnp.sum(h * w2, axis=0, keepdims=True)           # (1, TH*W)
    out_ref[...] = jax.nn.sigmoid(o + b2_ref[0, 0])      # lane-dense f32 store


def _pick_tile_rows(h, w, batch, target_px, max_px, min_steps=4):
    """Rows per tile.

    TH*W must be a multiple of 128 (lane-dense blocks).  Aim for ~target_px
    pixels per step (capped at max_px for VMEM), but keep at least `min_steps`
    grid steps so both v7x TensorCores get work even at batch 1.
    """
    base = 128 // math.gcd(w, 128)               # smallest TH with TH*W % 128 == 0
    want = min(max(target_px, base * w), max(max_px, base * w))
    rows = _round_up(max(base, want // w), base)
    rows = min(rows, _round_up(h, base))
    while batch * _cdiv(h, rows) < min_steps and rows > base:
        rows = max(base, _round_up(rows // 2, base))
    return rows


def localizer_classifier_forward(x_nchw, params, *, use_bf16=True, target_tile_px=8192):
    """Forward pass of LocalizerClassifier (i.e. self.model(x)) as a Pallas kernel.

    x_nchw: (B, C, H, W) float32  ->  (B, 1, H, W) float32 heatmap.
    `target_tile_px` (sweep 8192-16384) is capped so the live VMEM set per step
    stays well under the v7x 64 MiB budget.
    """
    w1, b1, w2, b2 = params["w1"], params["b1"], params["w2"], params["b2"]
    B, C, H, W = x_nchw.shape
    hidden = w1.shape[1]
    KC = KH * KW * C

    cdt = jnp.bfloat16 if use_bf16 else jnp.float32
    csize = 2 if use_bf16 else 4
    sub_pack = 16 if use_bf16 else 8
    KC_pad = _round_up(KC, sub_pack)             # sublane-pack-aligned MXU K dim

    # Rough live-VMEM bytes per tile pixel (double-buffered f32 input, patch
    # scratch + in-flight tap temporaries, f32 hidden activations, output).
    bytes_per_px = (2 * C * 4) + (2 * KC_pad * csize) + (2 * hidden * 4) + (2 * 4) + (C + 2) * csize
    max_px = max((24 << 20) // bytes_per_px, 256)

    TH = _pick_tile_rows(H, W, B, target_tile_px, max_px)
    Hp = _round_up(H, TH)
    NT = Hp // TH
    TPIX = TH * W                                # multiple of 128 by construction

    xr = x_nchw
    if Hp != H:
        xr = jnp.pad(xr, ((0, 0), (0, 0), (0, Hp - H), (0, 0)))

    # Per-tile halo rows (row above / below each tile); zeros at the image edges.
    # Packed as a single (B, 2*NT, C, W) array -> one input stream.
    zrow = jnp.zeros((B, C, 1, W), xr.dtype)
    top_rows = jnp.concatenate([zrow, xr[:, :, TH - 1:Hp - 1:TH, :]], axis=2)  # (B,C,NT,W)
    bot_rows = jnp.concatenate([xr[:, :, TH:Hp:TH, :], zrow], axis=2)          # (B,C,NT,W)
    halo = jnp.stack([top_rows, bot_rows], axis=3)                             # (B,C,NT,2,W)
    halo = jnp.transpose(halo, (0, 2, 3, 1, 4)).reshape(B, 2 * NT, C, W)

    x_flat = xr.reshape(B, C, Hp * W)            # flattened spatial, no 9x inflation

    # First-conv weight: transposed (hidden, 9C), zero-padded K, compute dtype.
    w1t = jnp.transpose(w1).astype(cdt)
    if KC_pad > KC:
        w1t = jnp.pad(w1t, ((0, 0), (0, KC_pad - KC)))
    # b1 and the 1x1-conv weight packed into one small f32 stream; b2 -> SMEM.
    aux = jnp.concatenate([jnp.reshape(b1, (hidden, 1)),
                           jnp.reshape(w2, (hidden, 1))], axis=1).astype(jnp.float32)
    b2s = jnp.reshape(b2, (1, 1)).astype(jnp.float32)

    kernel = functools.partial(
        _localizer_kernel, n_chan=C, width=W, tile_rows=TH, kc=KC, compute_dtype=cdt)

    vmem_limit = int(min(max(2 * bytes_per_px * TPIX + (4 << 20), 32 << 20), 48 << 20))

    out_flat = pl.pallas_call(
        kernel,
        out_shape=jax.ShapeDtypeStruct((B, 1, Hp * W), jnp.float32),
        grid=(B, NT),
        in_specs=[
            pl.BlockSpec((None, C, TPIX), lambda b, t: (b, 0, t)),      # image tile
            pl.BlockSpec((None, 2, C, W), lambda b, t: (b, t, 0, 0)),   # halo rows (above/below)
            pl.BlockSpec((hidden, KC_pad), lambda b, t: (0, 0)),        # w1^T (VMEM-resident)
            pl.BlockSpec((hidden, 2), lambda b, t: (0, 0)),             # b1 | w2
            pl.BlockSpec(memory_space=pltpu.MemorySpace.SMEM),          # b2 scalar
        ],
        out_specs=pl.BlockSpec((None, 1, TPIX), lambda b, t: (b, 0, t)),
        scratch_shapes=[pltpu.VMEM((KC_pad, TPIX), cdt)],               # im2col patch matrix
        compiler_params=pltpu.CompilerParams(
            dimension_semantics=("parallel", "parallel"),
            vmem_limit_bytes=vmem_limit),
    )(x_flat, halo, w1t, aux, b2s)

    out_flat = out_flat[:, :, :H * W]
    return out_flat.reshape(B, 1, H, W)


def init_params(key, c_in, hidden):
    """Deterministic synthetic weights (no checkpoint load)."""
    k1, k2, k3, k4 = jax.random.split(key, 4)
    w1 = jax.random.normal(k1, (KH * KW * c_in, hidden), jnp.float32) * 0.1
    b1 = jax.random.normal(k2, (1, hidden), jnp.float32) * 0.01
    w2 = jax.random.normal(k3, (hidden, 1), jnp.float32) * 0.1
    b2 = jax.random.normal(k4, (1, 1), jnp.float32) * 0.01
    return {"w1": w1, "b1": b1, "w2": w2, "b2": b2}


def _reference_forward(x_nchw, params):
    """Independent pure-JAX reference (lax convolutions, NCHW, f32)."""
    C = x_nchw.shape[1]
    hidden = params["w1"].shape[1]
    # (9*Cin, hidden) -> conv weight (hidden, Cin, 3, 3) matching tap order (ky, kx, cin)
    w1 = params["w1"].reshape(KH, KW, C, hidden).transpose(3, 2, 0, 1)
    w2 = params["w2"].reshape(hidden, 1).T.reshape(1, hidden, 1, 1)
    h = jax.lax.conv_general_dilated(
        x_nchw, w1, window_strides=(1, 1), padding=((1, 1), (1, 1)),
        dimension_numbers=("NCHW", "OIHW", "NCHW"))
    h = jnp.maximum(h + params["b1"].reshape(1, hidden, 1, 1), 0.0)
    o = jax.lax.conv_general_dilated(
        h, w2, window_strides=(1, 1), padding="VALID",
        dimension_numbers=("NCHW", "OIHW", "NCHW"))
    return jax.nn.sigmoid(o + params["b2"].reshape(1, 1, 1, 1))


if __name__ == "__main__":
    # --- canonical small shapes ---
    B, C, H, W = 2, 4, 16, 16
    hidden = 32

    key = jax.random.PRNGKey(0)
    kx_, kp = jax.random.split(key)
    x = jax.random.normal(kx_, (B, C, H, W), jnp.float32)
    params = init_params(kp, C, hidden)

    ref = jax.block_until_ready(_reference_forward(x, params))

    # f32 compute path: tight check (catches layout / tap-ordering bugs).
    out_f32 = jax.block_until_ready(
        localizer_classifier_forward(x, params, use_bf16=False))
    assert out_f32.shape == (B, 1, H, W), out_f32.shape
    err_f32 = float(jnp.max(jnp.abs(out_f32 - ref)))
    assert err_f32 < 5e-3, err_f32

    # bf16 MXU-operand path (default / fast): looser tolerance.
    out_bf16 = jax.block_until_ready(
        localizer_classifier_forward(x, params, use_bf16=True))
    assert out_bf16.shape == (B, 1, H, W), out_bf16.shape
    err_bf16 = float(jnp.max(jnp.abs(out_bf16 - ref)))
    assert err_bf16 < 5e-2, err_bf16

    # --- awkward-shape check: C not a multiple of 8, W not a multiple of 128,
    # H not a multiple of the row tile (exercises halo + row-padding paths). ---
    B2, C2, H2, W2, hidden2 = 1, 3, 21, 24, 16
    k1, k2 = jax.random.split(jax.random.PRNGKey(1))
    x2 = jax.random.normal(k1, (B2, C2, H2, W2), jnp.float32)
    p2 = init_params(k2, C2, hidden2)
    ref2 = jax.block_until_ready(_reference_forward(x2, p2))
    o2 = jax.block_until_ready(localizer_classifier_forward(x2, p2, use_bf16=False))
    e2 = float(jnp.max(jnp.abs(o2 - ref2)))
    assert o2.shape == (B2, 1, H2, W2) and e2 < 5e-3, (o2.shape, e2)
    o2b = jax.block_until_ready(localizer_classifier_forward(x2, p2, use_bf16=True))
    e2b = float(jnp.max(jnp.abs(o2b - ref2)))
    assert e2b < 5e-2, e2b

    # TODO(synk): forward_transform / get_loss rely on kornia-style warp_affine /
    # rotate and torch.rand inside the call; only forward() (the model hot path)
    # is implemented as a Pallas kernel.
    print("KERNEL_OK")
</pallas_src>

<mosaic_0001>
module attributes {stable_mosaic.version = 11 : i64} {
  func.func @_localizer_kernel(%arg0: i32, %arg1: i32, %arg2: memref<1x4x128xf32, #tpu.memory_space<vmem>>, %arg3: memref<1x2x4x16xf32, #tpu.memory_space<vmem>>, %arg4: memref<32x40xf32, #tpu.memory_space<vmem>>, %arg5: memref<32x2xf32, #tpu.memory_space<vmem>>, %arg6: memref<1x1xf32, #tpu.memory_space<smem>>, %arg7: memref<1x1x128xf32, #tpu.memory_space<vmem>>, %arg8: memref<40x128xf32, #tpu.memory_space<vmem>>) attributes {dimension_semantics = [#tpu.dimension_semantics<parallel>, #tpu.dimension_semantics<parallel>], iteration_bounds = array<i64: 2, 2>, scalar_prefetch = 0 : i64, scratch_operands = 1 : i64, tpu.core_type = #tpu.core_type<tc>, window_params = [{transform_indices = @transform_0, window_bounds = array<i64: 1, 4, 128>}, {transform_indices = @transform_1, window_bounds = array<i64: 1, 2, 4, 16>}, {pipeline_mode = #tpu.pipeline_mode<synchronous>, transform_indices = @transform_2, window_bounds = array<i64: 32, 40>}, {pipeline_mode = #tpu.pipeline_mode<synchronous>, transform_indices = @transform_3, window_bounds = array<i64: 32, 2>}, {transform_indices = @transform_4, window_bounds = array<i64: 1, 1>}, {transform_indices = @transform_5, window_bounds = array<i64: 1, 1, 128>}]} {
    %c0 = arith.constant 0 : index
    %c0_0 = arith.constant 0 : index
    %c0_1 = arith.constant 0 : index
    %0 = vector.load %arg2[%c0, %c0_0, %c0_1] : memref<1x4x128xf32, #tpu.memory_space<vmem>>, vector<1x4x128xf32>
    %1 = vector.shape_cast %0 : vector<1x4x128xf32> to vector<4x128xf32>
    %c0_2 = arith.constant 0 : index
    %c0_3 = arith.constant 0 : index
    %c0_4 = arith.constant 0 : index
    %c0_5 = arith.constant 0 : index
    %2 = vector.load %arg3[%c0_2, %c0_3, %c0_4, %c0_5] : memref<1x2x4x16xf32, #tpu.memory_space<vmem>>, vector<1x1x4x16xf32>
    %3 = vector.shape_cast %2 : vector<1x1x4x16xf32> to vector<4x16xf32>
    %c0_6 = arith.constant 0 : index
    %c1 = arith.constant 1 : index
    %c0_7 = arith.constant 0 : index
    %c0_8 = arith.constant 0 : index
    %4 = vector.load %arg3[%c0_6, %c1, %c0_7, %c0_8] : memref<1x2x4x16xf32, #tpu.memory_space<vmem>>, vector<1x1x4x16xf32>
    %5 = vector.shape_cast %4 : vector<1x1x4x16xf32> to vector<4x16xf32>
    %cst = arith.constant 0.000000e+00 : f32
    %6 = vector.broadcast %cst : f32 to vector<4x8xf32>
    %7 = tpu.concatenate %6, %3, %1, %5, %6 in 1 : vector<4x8xf32>, vector<4x16xf32>, vector<4x128xf32>, vector<4x16xf32>, vector<4x8xf32> -> vector<4x176xf32>
    %8 = tpu.iota {dimensions = array<i32: 1>} : vector<1x128xi32>
    %c16_i32 = arith.constant 16 : i32
    %c0_i32 = arith.constant 0 : i32
    %9 = arith.cmpi eq, %c16_i32, %c0_i32 : i32
    %c1_i32 = arith.constant 1 : i32
    %10 = arith.select %9, %c1_i32, %c16_i32 : i32
    %11 = vector.broadcast %10 : i32 to vector<1x128xi32>
    %12 = arith.remsi %8, %11 : vector<1x128xi32>
    %c0_i32_9 = arith.constant 0 : i32
    %13 = vector.broadcast %c0_i32_9 : i32 to vector<1x128xi32>
    %14 = arith.cmpi ne, %12, %13 : vector<1x128xi32>
    %c0_i32_10 = arith.constant 0 : i32
    %15 = vector.broadcast %c0_i32_10 : i32 to vector<1x128xi32>
    %16 = arith.cmpi slt, %12, %15 : vector<1x128xi32>
    %c0_i32_11 = arith.constant 0 : i32
    %17 = arith.cmpi slt, %10, %c0_i32_11 : i32
    %18 = vector.broadcast %17 : i1 to vector<1x128xi1>
    %19 = vector.broadcast %18 : vector<1x128xi1> to vector<1x128xi1>
    %20 = arith.xori %16, %19 : vector<1x128xi1>
    %21 = arith.andi %20, %14 : vector<1x128xi1>
    %22 = vector.broadcast %10 : i32 to vector<1x128xi32>
    %23 = arith.addi %12, %22 : vector<1x128xi32>
    %24 = arith.select %21, %23, %12 : vector<1x128xi1>, vector<1x128xi32>
    %c0_i32_12 = arith.constant 0 : i32
    %25 = vector.broadcast %c0_i32_12 : i32 to vector<1x128xi32>
    %26 = arith.cmpi eq, %24, %25 : vector<1x128xi32>
    %c15_i32 = arith.constant 15 : i32
    %27 = vector.broadcast %c15_i32 : i32 to vector<1x128xi32>
    %28 = arith.cmpi eq, %24, %27 : vector<1x128xi32>
    %29 = vector.extract_strided_slice %7 {offsets = [0, 7], sizes = [4, 128], strides = [1, 1]} : vector<4x176xf32> to vector<4x128xf32>
    %cst_13 = arith.constant 0.000000e+00 : f32
    %30 = vector.shape_cast %26 : vector<1x128xi1> to vector<1x128xi1>
    %31 = vector.broadcast %30 : vector<1x128xi1> to vector<4x128xi1>
    %32 = vector.broadcast %cst_13 : f32 to vector<4x128xf32>
    %33 = arith.select %31, %32, %29 : vector<4x128xi1>, vector<4x128xf32>
    %c0_14 = arith.constant 0 : index
    %c0_15 = arith.constant 0 : index
    %34 = vector.load %arg8[%c0_14, %c0_15] : memref<40x128xf32, #tpu.memory_space<vmem>>, vector<4x128xf32>
    tpu.vector_store %arg8[%c0_14, %c0_15], %33 {strides = array<i32>} : memref<40x128xf32, #tpu.memory_space<vmem>>, vector<4x128xf32>,
    %35 = vector.extract_strided_slice %7 {offsets = [0, 8], sizes = [4, 128], strides = [1, 1]} : vector<4x176xf32> to vector<4x128xf32>
    %c4 = arith.constant 4 : index
    %c0_16 = arith.constant 0 : index
    %36 = vector.load %arg8[%c4, %c0_16] : memref<40x128xf32, #tpu.memory_space<vmem>>, vector<4x128xf32>
    tpu.vector_store %arg8[%c4, %c0_16], %35 {strides = array<i32>} : memref<40x128xf32, #tpu.memory_space<vmem>>, vector<4x128xf32>,
    %37 = vector.extract_strided_slice %7 {offsets = [0, 9], sizes = [4, 128], strides = [1, 1]} : vector<4x176xf32> to vector<4x128xf32>
    %cst_17 = arith.constant 0.000000e+00 : f32
    %38 = vector.shape_cast %28 : vector<1x128xi1> to vector<1x128xi1>
    %39 = vector.broadcast %38 : vector<1x128xi1> to vector<4x128xi1>
    %40 = vector.broadcast %cst_17 : f32 to vector<4x128xf32>
    %41 = arith.select %39, %40, %37 : vector<4x128xi1>, vector<4x128xf32>
    %c8 = arith.constant 8 : index
    %c0_18 = arith.constant 0 : index
    %42 = vector.load %arg8[%c8, %c0_18] : memref<40x128xf32, #tpu.memory_space<vmem>>, vector<4x128xf32>
    tpu.vector_store %arg8[%c8, %c0_18], %41 {strides = array<i32>} : memref<40x128xf32, #tpu.memory_space<vmem>>, vector<4x128xf32>,
    %43 = vector.extract_strided_slice %7 {offsets = [0, 23], sizes = [4, 128], strides = [1, 1]} : vector<4x176xf32> to vector<4x128xf32>
    %cst_19 = arith.constant 0.000000e+00 : f32
    %44 = vector.shape_cast %26 : vector<1x128xi1> to vector<1x128xi1>
    %45 = vector.broadcast %44 : vector<1x128xi1> to vector<4x128xi1>
    %46 = vector.broadcast %cst_19 : f32 to vector<4x128xf32>
    %47 = arith.select %45, %46, %43 : vector<4x128xi1>, vector<4x128xf32>
    %c12 = arith.constant 12 : index
    %c0_20 = arith.constant 0 : index
    %48 = vector.load %arg8[%c12, %c0_20] : memref<40x128xf32, #tpu.memory_space<vmem>>, vector<4x128xf32>
    tpu.vector_store %arg8[%c12, %c0_20], %47 {strides = array<i32>} : memref<40x128xf32, #tpu.memory_space<vmem>>, vector<4x128xf32>,
    %49 = vector.extract_strided_slice %7 {offsets = [0, 24], sizes = [4, 128], strides = [1, 1]} : vector<4x176xf32> to vector<4x128xf32>
    %c16 = arith.constant 16 : index
    %c0_21 = arith.constant 0 : index
    %50 = vector.load %arg8[%c16, %c0_21] : memref<40x128xf32, #tpu.memory_space<vmem>>, vector<4x128xf32>
    tpu.vector_store %arg8[%c16, %c0_21], %49 {strides = array<i32>} : memref<40x128xf32, #tpu.memory_space<vmem>>, vector<4x128xf32>,
    %51 = vector.extract_strided_slice %7 {offsets = [0, 25], sizes = [4, 128], strides = [1, 1]} : vector<4x176xf32> to vector<4x128xf32>
    %cst_22 = arith.constant 0.000000e+00 : f32
    %52 = vector.shape_cast %28 : vector<1x128xi1> to vector<1x128xi1>
    %53 = vector.broadcast %52 : vector<1x128xi1> to vector<4x128xi1>
    %54 = vector.broadcast %cst_22 : f32 to vector<4x128xf32>
    %55 = arith.select %53, %54, %51 : vector<4x128xi1>, vector<4x128xf32>
    %c20 = arith.constant 20 : index
    %c0_23 = arith.constant 0 : index
    %56 = vector.load %arg8[%c20, %c0_23] : memref<40x128xf32, #tpu.memory_space<vmem>>, vector<4x128xf32>
    tpu.vector_store %arg8[%c20, %c0_23], %55 {strides = array<i32>} : memref<40x128xf32, #tpu.memory_space<vmem>>, vector<4x128xf32>,
    %57 = vector.extract_strided_slice %7 {offsets = [0, 39], sizes = [4, 128], strides = [1, 1]} : vector<4x176xf32> to vector<4x128xf32>
    %cst_24 = arith.constant 0.000000e+00 : f32
    %58 = vector.shape_cast %26 : vector<1x128xi1> to vector<1x128xi1>
    %59 = vector.broadcast %58 : vector<1x128xi1> to vector<4x128xi1>
    %60 = vector.broadcast %cst_24 : f32 to vector<4x128xf32>
    %61 = arith.select %59, %60, %57 : vector<4x128xi1>, vector<4x128xf32>
    %c24 = arith.constant 24 : index
    %c0_25 = arith.constant 0 : index
    %62 = vector.load %arg8[%c24, %c0_25] : memref<40x128xf32, #tpu.memory_space<vmem>>, vector<4x128xf32>
    tpu.vector_store %arg8[%c24, %c0_25], %61 {strides = array<i32>} : memref<40x128xf32, #tpu.memory_space<vmem>>, vector<4x128xf32>,
    %63 = vector.extract_strided_slice %7 {offsets = [0, 40], sizes = [4, 128], strides = [1, 1]} : vector<4x176xf32> to vector<4x128xf32>
    %c28 = arith.constant 28 : index
    %c0_26 = arith.constant 0 : index
    %64 = vector.load %arg8[%c28, %c0_26] : memref<40x128xf32, #tpu.memory_space<vmem>>, vector<4x128xf32>
    tpu.vector_store %arg8[%c28, %c0_26], %63 {strides = array<i32>} : memref<40x128xf32, #tpu.memory_space<vmem>>, vector<4x128xf32>,
    %65 = vector.extract_strided_slice %7 {offsets = [0, 41], sizes = [4, 128], strides = [1, 1]} : vector<4x176xf32> to vector<4x128xf32>
    %cst_27 = arith.constant 0.000000e+00 : f32
    %66 = vector.shape_cast %28 : vector<1x128xi1> to vector<1x128xi1>
    %67 = vector.broadcast %66 : vector<1x128xi1> to vector<4x128xi1>
    %68 = vector.broadcast %cst_27 : f32 to vector<4x128xf32>
    %69 = arith.select %67, %68, %65 : vector<4x128xi1>, vector<4x128xf32>
    %c32 = arith.constant 32 : index
    %c0_28 = arith.constant 0 : index
    %70 = vector.load %arg8[%c32, %c0_28] : memref<40x128xf32, #tpu.memory_space<vmem>>, vector<4x128xf32>
    tpu.vector_store %arg8[%c32, %c0_28], %69 {strides = array<i32>} : memref<40x128xf32, #tpu.memory_space<vmem>>, vector<4x128xf32>,
    %cst_29 = arith.constant 0.000000e+00 : f32
    %71 = vector.broadcast %cst_29 : f32 to vector<4x128xf32>
    %c36 = arith.constant 36 : index
    %c0_30 = arith.constant 0 : index
    %72 = vector.load %arg8[%c36, %c0_30] : memref<40x128xf32, #tpu.memory_space<vmem>>, vector<4x128xf32>
    tpu.vector_store %arg8[%c36, %c0_30], %71 {strides = array<i32>} : memref<40x128xf32, #tpu.memory_space<vmem>>, vector<4x128xf32>,
    %c0_31 = arith.constant 0 : index
    %c0_32 = arith.constant 0 : index
    %73 = vector.load %arg4[%c0_31, %c0_32] : memref<32x40xf32, #tpu.memory_space<vmem>>, vector<32x40xf32>
    %c0_33 = arith.constant 0 : index
    %c0_34 = arith.constant 0 : index
    %74 = vector.load %arg8[%c0_33, %c0_34] : memref<40x128xf32, #tpu.memory_space<vmem>>, vector<40x128xf32>
    %cst_35 = arith.constant dense<0.000000e+00> : vector<32x128xf32>
    %75 = tpu.matmul %73, %74, %cst_35 {dimension_numbers = #tpu.dot_dimension_numbers<[1], [0], [0], [1], [0, 0, 1, 1], [], []>} : vector<32x40xf32>, vector<40x128xf32>, vector<32x128xf32> -> vector<32x128xf32>
    %c0_36 = arith.constant 0 : index
    %c0_37 = arith.constant 0 : index
    %76 = vector.load %arg5[%c0_36, %c0_37] : memref<32x2xf32, #tpu.memory_space<vmem>>, vector<32x1xf32>
    %c0_38 = arith.constant 0 : index
    %c1_39 = arith.constant 1 : index
    %77 = vector.load %arg5[%c0_38, %c1_39] : memref<32x2xf32, #tpu.memory_space<vmem>>, vector<32x1xf32>
    %78 = vector.broadcast %76 : vector<32x1xf32> to vector<32x128xf32>
    %79 = arith.addf %75, %78 : vector<32x128xf32>
    %cst_40 = arith.constant 0.000000e+00 : f32
    %80 = vector.broadcast %cst_40 : f32 to vector<32x128xf32>
    %81 = arith.maximumf %79, %80 : vector<32x128xf32>
    %82 = vector.broadcast %77 : vector<32x1xf32> to vector<32x128xf32>
    %83 = arith.mulf %81, %82 : vector<32x128xf32>
    %cst_41 = arith.constant dense<0.000000e+00> : vector<128xf32>
    %84 = vector.multi_reduction <add>, %83, %cst_41 [0] : vector<32x128xf32> to vector<128xf32>
    %85 = vector.shape_cast %84 : vector<128xf32> to vector<1x128xf32>
    %c0_42 = arith.constant 0 : index
    %c0_43 = arith.constant 0 : index
    %86 = memref.load %arg6[%c0_42, %c0_43] : memref<1x1xf32, #tpu.memory_space<smem>>
    %87 = vector.broadcast %86 : f32 to vector<1x128xf32>
    %88 = arith.addf %85, %87 : vector<1x128xf32>
    %89 = arith.negf %88 : vector<1x128xf32>
    %90 = math.exp %89 : vector<1x128xf32>
    %cst_44 = arith.constant 1.000000e+00 : f32
    %91 = vector.broadcast %cst_44 : f32 to vector<1x128xf32>
    %92 = arith.addf %91, %90 : vector<1x128xf32>
    %93 = arith.divf %91, %92 : vector<1x128xf32>
    %c0_45 = arith.constant 0 : index
    %c0_46 = arith.constant 0 : index
    %c0_47 = arith.constant 0 : index
    %94 = vector.load %arg7[%c0_45, %c0_46, %c0_47] : memref<1x1x128xf32, #tpu.memory_space<vmem>>, vector<1x1x128xf32>
    %95 = vector.shape_cast %94 : vector<1x1x128xf32> to vector<1x128xf32>
    %96 = vector.shape_cast %93 : vector<1x128xf32> to vector<1x1x128xf32>
    tpu.vector_store %arg7[%c0_45, %c0_46, %c0_47], %96 {strides = array<i32>} : memref<1x1x128xf32, #tpu.memory_space<vmem>>, vector<1x1x128xf32>,
    return
  }
  func.func @transform_0(%arg0: i32, %arg1: i32) -> (i32, i32, i32) {
    %c0_i32 = arith.constant 0 : i32
    %c0_i32_0 = arith.constant 0 : i32
    return %arg0, %c0_i32, %arg1 : i32, i32, i32
  }
  func.func @transform_1(%arg0: i32, %arg1: i32) -> (i32, i32, i32, i32) {
    %c0_i32 = arith.constant 0 : i32
    %c0_i32_0 = arith.constant 0 : i32
    %c0_i32_1 = arith.constant 0 : i32
    return %arg0, %arg1, %c0_i32, %c0_i32_0 : i32, i32, i32, i32
  }
  func.func @transform_2(%arg0: i32, %arg1: i32) -> (i32, i32) {
    %c0_i32 = arith.constant 0 : i32
    %c0_i32_0 = arith.constant 0 : i32
    %c0_i32_1 = arith.constant 0 : i32
    return %c0_i32, %c0_i32_0 : i32, i32
  }
  func.func @transform_3(%arg0: i32, %arg1: i32) -> (i32, i32) {
    %c0_i32 = arith.constant 0 : i32
    %c0_i32_0 = arith.constant 0 : i32
    %c0_i32_1 = arith.constant 0 : i32
    return %c0_i32, %c0_i32_0 : i32, i32
  }
  func.func @transform_4(%arg0: i32, %arg1: i32) -> (i32, i32) {
    %c0_i32 = arith.constant 0 : i32
    %c0_i32_0 = arith.constant 0 : i32
    %c0_i32_1 = arith.constant 0 : i32
    return %c0_i32, %c0_i32_0 : i32, i32
  }
  func.func @transform_5(%arg0: i32, %arg1: i32) -> (i32, i32, i32) {
    %c0_i32 = arith.constant 0 : i32
    %c0_i32_0 = arith.constant 0 : i32
    return %arg0, %c0_i32, %arg1 : i32, i32, i32
  }
}

</mosaic_0001>

<llo_original>
// kernel: tpu_custom_call.1
$region0: #{tpu_custom_call.1}
  #allocation0 [shape = 'u32[]', space=smem, size = 0x4, offset = 0x4, fixed_abs, tag = 'smem constant byte address 0x4 - core index']
  #allocation1 [shape = 'u32[144,128]{1,0:T(1,128)}', space=vmem, size = 0x12000, scoped, tag = 'internal scratch']
  #allocation2 [shape = 'f32[40,128]{1,0:T(8,128)}', space=vmem, size = 0x5000, scoped, tag = 'scratch operand']
  #allocation3 [shape = 'f32[1,1]{1,0:T(1,128)S(6)}', space=smem, size = 0x200, scoped, tag = 'scoped memory for tpu_custom_call.1']
  %s0 = inlined_call_operand.hbm [shape: f32[2,4,256], index: 0, kind: input, shape index: {}]
  %s1 = inlined_call_operand.vmem [shape: f32[2,4,4,16], index: 1, kind: input, shape index: {}]
  %s2 = inlined_call_operand.hbm [shape: f32[32,40], index: 2, kind: input, shape index: {}]
  %s3 = inlined_call_operand.vmem [shape: f32[32,2], index: 3, kind: input, shape index: {}]
  %s4 = inlined_call_operand.<no memory space> [shape: f32[1,1], index: 4, kind: input, shape index: {}]
  %s5 = inlined_call_operand.hbm [shape: f32[2,1,256], index: 5, kind: output, shape index: {}]
  %s6 = sld [smem:[#allocation0]]
  $region61: #{tpu_custom_call.1} parent=0
    _
  %s8 = ssub.s32 1, %s6
  %s9 = scalar_select 0, %s8, %s6
  %10 = sst [smem:[#allocation3]] %s4
  $region1: #{tpu_custom_call.1} parent=0
    #allocation4 [shape = 'u8[4096]{0}', space=vmem, size = 0x1000, scoped, tag = 'input window, operand 0']
    #allocation5 [shape = 's32[2]{0}', space=sflag, size = 0x8, scoped, tag = 'scoped memory for tpu_custom_call.1']
    #allocation6 [shape = 's32[2]{0}', space=sflag, size = 0x8, scoped, tag = 'scoped memory for tpu_custom_call.1']
    #allocation7 [shape = 'u8[16384]{0}', space=vmem, size = 0x4000, scoped, tag = 'input window, operand 2, single buffered']
    #allocation8 [shape = 's32[1]{0}', space=sflag, size = 0x4, scoped, tag = 'scoped memory for tpu_custom_call.1']
    #allocation9 [shape = 'u8[1024]{0}', space=vmem, size = 0x400, scoped, tag = 'output window, operand 0']
    %11 = vsyncpa [#allocation5], 0
    %s12 = scalar_lea.sflag [#allocation5], 1
    %13 = vsyncpa %s12, 0
    %14 = vsyncpa [#allocation8], 0
    %15 = vsyncpa [#allocation6], 0
    %s16 = scalar_lea.sflag [#allocation6], 1
    %17 = vsyncpa %s16, 0
    loop: start=0, step=1, limit=6
    $region2: #{tpu_custom_call.1} parent=1 // loop_pre_header
      _
    $region3: #{tpu_custom_call.1} parent=1 // loop_header
      %s19 = sphi 0, %s23
      %p20 = scmp.ge.s32.totalorder %s19, 6
      %s26 = sphi 0, %s38
      %s27 = sphi 0, %s34
      %s28 = sphi 0, %s26
      %s29 = sphi 0, %s27
      %s30 = sphi 0, %s28
      %s31 = sphi 0, %s29
      %s43 = sphi 0, %s45
      %s46 = sphi 0, %s43
      %s47 = sphi 0, %s46
      %s63 = sphi 0, %s47
      %s71 = sphi 0, %s73
      %s74 = sphi 0, %s71
      %s75 = sphi 0, %s74
      %s91 = sphi 0, %s75
      %s95 = sphi 0, %s95
      %s97 = sphi 0, %s95
      %s98 = sphi 0, %s97
      %s112 = sphi 0, %s98
      %s116 = sphi 0, %s116
      %s118 = sphi 0, %s116
      %s119 = sphi 0, %s118
      %s133 = sphi 0, %s119
      %s137 = sphi 0, %s137
      %s139 = sphi 0, %s137
      %s140 = sphi 0, %s139
      %s154 = sphi 0, %s140
      %s162 = sphi 0, %s164
      %s165 = sphi 0, %s162
      %s166 = sphi 0, %s165
      %s182 = sphi 0, %s166
    $region4: #{tpu_custom_call.1} parent=1 // loop_header_branch
      %22 = sbr.rel (%p20) target = $region8
    $region5: #{tpu_custom_call.1} parent=1 // loop_body
      %s24 = ssub.s32 %s19, 1
      %s25 = ssub.s32 %s19, 2
      %s32 = sadd.s32 1, %s27
      %p33 = scmp.ge.s32.totalorder %s32, 2
      %s34 = scalar_select %p33, 0, %s32
      %s35 = sadd.s32 1, %s26
      %s36 = scalar_select %p33, %s35, %s26
      %p37 = scmp.ge.s32.totalorder %s36, 2
      %s38 = scalar_select %p37, 0, %s36
      %s39 = ssub.s32 %s26, %s38
      %s40 = ssub.s32 %s27, %s34
      %s41 = sor.u32 %s39, %s40
      %p42 = scmp.eq.s32.totalorder %s41, 0
      %s44 = sadd.s32 %s43, 1
      %s45 = scalar_select %p42, %s43, %s44
      %p48 = pneg %p42
      %p49 = scmp.eq.s32.totalorder %s19, 3
      %p50 = por %p48, %p49
      %p51 = scmp.ne.s32.totalorder %s43, %s46
      %p52 = scmp.eq.s32.totalorder %s19, 0
      %p53 = por %p51, %p52
      %p54 = scmp.ne.s32.totalorder %s43, %s46
      %p55 = scmp.eq.s32.totalorder %s24, 3
      %p56 = por %p54, %p55
      %p57 = scmp.ne.s32.totalorder %s46, %s47
      %p58 = scmp.eq.s32.totalorder %s24, 0
      %p59 = por %p57, %p58
      %p60 = scmp.ne.s32.totalorder %s46, %s47
      %p61 = scmp.eq.s32.totalorder %s25, 3
      %p62 = por %p60, %p61
      %p64 = scmp.ne.s32.totalorder %s47, %s63
      %p65 = scmp.eq.s32.totalorder %s25, 0
      %p66 = por %p64, %p65
      %s67 = ssub.s32 %s26, %s38
      %s68 = ssub.s32 %s27, %s34
      %s69 = sor.u32 %s67, %s68
      %p70 = scmp.eq.s32.totalorder %s69, 0
      %s72 = sadd.s32 %s71, 1
      %s73 = scalar_select %p70, %s71, %s72
      %p76 = pneg %p70
      %p77 = scmp.eq.s32.totalorder %s19, 3
      %p78 = por %p76, %p77
      %p79 = scmp.ne.s32.totalorder %s71, %s74
      %p80 = scmp.eq.s32.totalorder %s19, 0
      %p81 = por %p79, %p80
      %p82 = scmp.ne.s32.totalorder %s71, %s74
      %p83 = scmp.eq.s32.totalorder %s24, 3
      %p84 = por %p82, %p83
      %p85 = scmp.ne.s32.totalorder %s74, %s75
      %p86 = scmp.eq.s32.totalorder %s24, 0
      %p87 = por %p85, %p86
      %p88 = scmp.ne.s32.totalorder %s74, %s75
      %p89 = scmp.eq.s32.totalorder %s25, 3
      %p90 = por %p88, %p89
      %p92 = scmp.ne.s32.totalorder %s75, %s91
      %p93 = scmp.eq.s32.totalorder %s25, 0
      %p94 = por %p92, %p93
      %s96 = sadd.s32 %s95, 1
      %p99 = scmp.eq.s32.totalorder %s19, 3
      %p100 = scmp.ne.s32.totalorder %s95, %s97
      %p101 = scmp.eq.s32.totalorder %s19, 0
      %p102 = por %p100, %p101
      %p103 = scmp.ne.s32.totalorder %s95, %s97
      %p104 = scmp.eq.s32.totalorder %s24, 3
      %p105 = por %p103, %p104
      %p106 = scmp.ne.s32.totalorder %s97, %s98
      %p107 = scmp.eq.s32.totalorder %s24, 0
      %p108 = por %p106, %p107
      %p109 = scmp.ne.s32.totalorder %s97, %s98
      %p110 = scmp.eq.s32.totalorder %s25, 3
      %p111 = por %p109, %p110
      %p113 = scmp.ne.s32.totalorder %s98, %s112
      %p114 = scmp.eq.s32.totalorder %s25, 0
      %p115 = por %p113, %p114
      %s117 = sadd.s32 %s116, 1
      %p120 = scmp.eq.s32.totalorder %s19, 3
      %p121 = scmp.ne.s32.totalorder %s116, %s118
      %p122 = scmp.eq.s32.totalorder %s19, 0
      %p123 = por %p121, %p122
      %p124 = scmp.ne.s32.totalorder %s116, %s118
      %p125 = scmp.eq.s32.totalorder %s24, 3
      %p126 = por %p124, %p125
      %p127 = scmp.ne.s32.totalorder %s118, %s119
      %p128 = scmp.eq.s32.totalorder %s24, 0
      %p129 = por %p127, %p128
      %p130 = scmp.ne.s32.totalorder %s118, %s119
      %p131 = scmp.eq.s32.totalorder %s25, 3
      %p132 = por %p130, %p131
      %p134 = scmp.ne.s32.totalorder %s119, %s133
      %p135 = scmp.eq.s32.totalorder %s25, 0
      %p136 = por %p134, %p135
      %s138 = sadd.s32 %s137, 1
      %p141 = scmp.eq.s32.totalorder %s19, 3
      %p142 = scmp.ne.s32.totalorder %s137, %s139
      %p143 = scmp.eq.s32.totalorder %s19, 0
      %p144 = por %p142, %p143
      %p145 = scmp.ne.s32.totalorder %s137, %s139
      %p146 = scmp.eq.s32.totalorder %s24, 3
      %p147 = por %p145, %p146
      %p148 = scmp.ne.s32.totalorder %s139, %s140
      %p149 = scmp.eq.s32.totalorder %s24, 0
      %p150 = por %p148, %p149
      %p151 = scmp.ne.s32.totalorder %s139, %s140
      %p152 = scmp.eq.s32.totalorder %s25, 3
      %p153 = por %p151, %p152
      %p155 = scmp.ne.s32.totalorder %s140, %s154
      %p156 = scmp.eq.s32.totalorder %s25, 0
      %p157 = por %p155, %p156
      %s158 = ssub.s32 %s26, %s38
      %s159 = ssub.s32 %s27, %s34
      %s160 = sor.u32 %s158, %s159
      %p161 = scmp.eq.s32.totalorder %s160, 0
      %s163 = sadd.s32 %s162, 1
      %s164 = scalar_select %p161, %s162, %s163
      %p167 = pneg %p161
      %p168 = scmp.eq.s32.totalorder %s19, 3
      %p169 = por %p167, %p168
      %p170 = scmp.ne.s32.totalorder %s162, %s165
      %p171 = scmp.eq.s32.totalorder %s19, 0
      %p172 = por %p170, %p171
      %p173 = scmp.ne.s32.totalorder %s162, %s165
      %p174 = scmp.eq.s32.totalorder %s24, 3
      %p175 = por %p173, %p174
      %p176 = scmp.ne.s32.totalorder %s165, %s166
      %p177 = scmp.eq.s32.totalorder %s24, 0
      %p178 = por %p176, %p177
      %p179 = scmp.ne.s32.totalorder %s165, %s166
      %p180 = scmp.eq.s32.totalorder %s25, 3
      %p181 = por %p179, %p180
      %p183 = scmp.ne.s32.totalorder %s166, %s182
      %p184 = scmp.eq.s32.totalorder %s25, 0
      %p185 = por %p183, %p184
      %p186 = scmp.le.s32.totalorder 1, %s19
      %p187 = scmp.lt.s32.totalorder %s19, 5
      %p188 = pnand %p186, %p187
      %p189 = pneg %p188
      // Predicated region
      $region9: #{tpu_custom_call.1} parent=5 // pred_check
        _
      $region10: #{tpu_custom_call.1} parent=5 // pred_check_branch
        %191 = sbr.rel (%p188) target = $region12
      $region11: #{tpu_custom_call.1} parent=5 // pred_region
        %s192 = ssub.s32 %s19, 1
        // Predicated region
        $region13: #{tpu_custom_call.1} parent=11 // pred_check
          %p193 = pneg %p108
        $region14: #{tpu_custom_call.1} parent=11 // pred_check_branch
          %195 = sbr.rel (%p193) target = $region16
        $region15: #{tpu_custom_call.1} parent=11 // pred_region
          %s197 = ssub.s32 512, 512
          %198 = vsyncadd [#allocation8], %s197
          %s199 = sshll.u32 [#allocation7], 4
          %s200 = int_to_ptr.vmem [resolvable:$true] %s199
          %205 = dma.hbm_to_vmem [thread:$0]  %s2, 512, %s200, [#allocation8], 128, 128, 8
        $region16: #{tpu_custom_call.1} parent=11 // pred_fallthru
          _
        // Predicated region
        $region17: #{tpu_custom_call.1} parent=11 // pred_check
          %p206 = pneg %p129
        $region18: #{tpu_custom_call.1} parent=11 // pred_check_branch
          %208 = sbr.rel (%p206) target = $region20
        $region19: #{tpu_custom_call.1} parent=11 // pred_region
          _
        $region20: #{tpu_custom_call.1} parent=11 // pred_fallthru
          _
        // Predicated region
        $region21: #{tpu_custom_call.1} parent=11 // pred_check
          %p209 = pneg %p150
        $region22: #{tpu_custom_call.1} parent=11 // pred_check_branch
          %211 = sbr.rel (%p209) target = $region24
        $region23: #{tpu_custom_call.1} parent=11 // pred_region
          _
        $region24: #{tpu_custom_call.1} parent=11 // pred_fallthru
          _
      $region12: #{tpu_custom_call.1} parent=5 // pred_fallthru
        _
      %p212 = scmp.lt.s32.totalorder %s19, 4
      // Predicated region
      $region25: #{tpu_custom_call.1} parent=5 // pred_check
        %p213 = pneg %p212
      $region26: #{tpu_custom_call.1} parent=5 // pred_check_branch
        %215 = sbr.rel (%p213) target = $region28
      $region27: #{tpu_custom_call.1} parent=5 // pred_region
        // Predicated region
        $region29: #{tpu_custom_call.1} parent=27 // pred_check
          %p216 = pneg %p53
        $region30: #{tpu_custom_call.1} parent=27 // pred_check_branch
          %218 = sbr.rel (%p216) target = $region32
        $region31: #{tpu_custom_call.1} parent=27 // pred_region
          %s219 = sand.u32 %s43, 1
          %s220 = scalar_lea.sflag [#allocation5], %s219
          %s221 = sand.u32 %s43, 1
          %s222 = smul.addr %s221, 4
          %s223 = scalar_lea.vmem [#allocation4], %s222
          %s225 = ssub.s32 64, 64
          %226 = vsyncadd %s220, %s225
          %s227 = smul.addr %s26, 2
          %s228 = sadd.s32 %s27, %s227
          %s229 = smul.addr %s228, 64
          %s230 = scalar_lea.hbm %s0, %s229
          %s232 = sshll.u32 %s223, 4
          %s233 = int_to_ptr.vmem [resolvable:$true] %s232
          %235 = dma.hbm_to_vmem [thread:$0]  %s230, 64, %s233, %s220
        $region32: #{tpu_custom_call.1} parent=27 // pred_fallthru
          _
        // Predicated region
        $region33: #{tpu_custom_call.1} parent=27 // pred_check
          %p236 = pneg %p81
        $region34: #{tpu_custom_call.1} parent=27 // pred_check_branch
          %238 = sbr.rel (%p236) target = $region36
        $region35: #{tpu_custom_call.1} parent=27 // pred_region
          %s239 = smul.u32 2, %s27
          %p240 = scmp.lt.s32.totalorder %s26, 1
          %s241 = scalar_select %p240, %s26, 1
          %p242 = scmp.lt.s32.totalorder %s239, 3
          %s243 = scalar_select %p242, %s239, 3
          %s244 = smul.addr %s241, 4
          %s245 = sadd.s32 %s243, %s244
          %s246 = smul.addr %s245, 4
          %s247 = scalar_lea.vmem %s1, %s246
          %s248 = smul.u32 2, %s27
        $region36: #{tpu_custom_call.1} parent=27 // pred_fallthru
          _
      $region28: #{tpu_custom_call.1} parent=5 // pred_fallthru
        _
      %p249 = scmp.le.s32.totalorder 1, %s19
      %p250 = scmp.lt.s32.totalorder %s19, 5
      %p251 = pnand %p249, %p250
      %p252 = pneg %p251
      // Predicated region
      $region37: #{tpu_custom_call.1} parent=5 // pred_check
        _
      $region38: #{tpu_custom_call.1} parent=5 // pred_check_branch
        %254 = sbr.rel (%p251) target = $region40
      $region39: #{tpu_custom_call.1} parent=5 // pred_region
        %s255 = ssub.s32 %s19, 1
        %s256 = sand.u32 %s46, 1
        %s257 = scalar_lea.sflag [#allocation5], %s256
        %s258 = sand.u32 %s46, 1
        %s259 = smul.addr %s258, 4
        %s260 = scalar_lea.vmem [#allocation4], %s259
        // Predicated region
        $region41: #{tpu_custom_call.1} parent=39 // pred_check
          %p261 = pneg %p59
        $region42: #{tpu_custom_call.1} parent=39 // pred_check_branch
          %263 = sbr.rel (%p261) target = $region44
        $region43: #{tpu_custom_call.1} parent=39 // pred_region
          %264 = dma.done %s257, 64
        $region44: #{tpu_custom_call.1} parent=39 // pred_fallthru
          _
        // Predicated region
        $region45: #{tpu_custom_call.1} parent=39 // pred_check
          %p265 = pneg %p108
        $region46: #{tpu_custom_call.1} parent=39 // pred_check_branch
          %267 = sbr.rel (%p265) target = $region48
        $region47: #{tpu_custom_call.1} parent=39 // pred_region
          %268 = dma.done [#allocation8], 512
        $region48: #{tpu_custom_call.1} parent=39 // pred_fallthru
          _
        %s269 = sand.u32 %s46, 1
        %s270 = scalar_lea.sflag [#allocation5], %s269
        %s271 = sand.u32 %s46, 1
        %s272 = smul.addr %s271, 4
        %s273 = scalar_lea.vmem [#allocation4], %s272
        %p274 = pneg %p59
        %p275 = pneg %p56
        %s276 = smul.u32 2, %s29
        %p277 = scmp.lt.s32.totalorder %s28, 1
        %s278 = scalar_select %p277, %s28, 1
        %p279 = scmp.lt.s32.totalorder %s276, 3
        %s280 = scalar_select %p279, %s276, 3
        %s281 = smul.addr %s278, 4
        %s282 = sadd.s32 %s280, %s281
        %s283 = smul.addr %s282, 4
        %s284 = scalar_lea.vmem %s1, %s283
        %p285 = pneg %p87
        %p286 = pneg %p84
        %p287 = pneg %p108
        %p288 = pneg %p105
        %p289 = pneg %p129
        %p290 = pneg %p126
        %p291 = pneg %p150
        %p292 = pneg %p147
        %p293 = pneg %p178
        %p294 = pneg %p175
        %s295 = sand.u32 %s165, 1
        %s296 = scalar_lea.sflag [#allocation6], %s295
        %s297 = sand.u32 %s165, 1
        %s298 = scalar_lea.vmem [#allocation9], %s297
        %s299 = smul.u32 2, %s29
        %p300 = scmp.lt.s32.totalorder %s28, 1
        %s301 = scalar_select %p300, %s28, 1
        %p302 = scmp.lt.s32.totalorder %s299, 3
        %s303 = scalar_select %p302, %s299, 3
        %s304 = smul.addr %s301, 4
        %s305 = sadd.s32 %s303, %s304
        %s306 = smul.addr %s305, 4
        %s307 = scalar_lea.vmem %s1, %s306
        %s308 = smul.u32 2, %s29
        %v309 = vld [vmem:[%s260] sm:$0xf]
        %v310 = vld [vmem:[%s307] sm:$0xf]
        %s311 = scalar_lea.vmem %s307, 4
        %v312 = vld [vmem:[%s311] sm:$0xf]
        %314 = vrot.lane.b32.xlu0 %v310, 8
        %v315 = vpop.permute.xlu0 %314
        %318 = vrot.lane.b32.xlu0 %v309, 24
        %v319 = vpop.permute.xlu0 %318
        %322 = vrot.lane.b32.xlu0 %v312, 24
        %v323 = vpop.permute.xlu0 %322
        %vm325 = vcmask 64512
        %v326 = vsel %vm325, 0.0, %v315
        %vm327 = vcmask 195584
        %v328 = vsel %vm327, %v326, %v319
        %v329 = vsel %vm327, %v319, %v323
        %vm330 = vcmask 326656
        %v331 = vsel %vm330, %v329, 0.0
        %v332 = vlaneseq
        %v333 = vand.u32 %v332, 127
        %vm334 = vcmp.lt.s32.totalorder %v333, 0
        %v335 = vsub.s32 0, %v333
        %v336 = vsel %vm334, %v335, %v333
        %v337 = vshrl.u32 %v336, 4
        %v338 = vand.u32 %v336, 15
        %v339 = vsub.s32 0, %v338
        %v340 = vsel %vm334, %v339, %v338
        %vm341 = vcmp.ne.s32.totalorder %v340, 0
        %vm342 = vcmp.lt.s32.totalorder %v340, 0
        %vm343 = vmand %vm342, %vm341
        %v344 = vadd.s32 %v340, 16
        %v345 = vsel %vm343, %v344, %v340
        %vm346 = vcmp.eq.s32.totalorder %v345, 0
        %vm347 = vcmp.eq.s32.totalorder %v345, 15
        %v348 = vsel %vm346, 1, 0
        %vm349 = vcmp.eq.s32.totalorder %v348, 1
        %352 = vrot.lane.b32.xlu0 %v328, 121
        %v353 = vpop.permute.xlu0 %352
        %354 = vrot.lane.b32.xlu0 %v331, 121
        %v355 = vpop.permute.xlu0 %354
        %vm356 = vcmask 990208
        %v357 = vsel %vm356, %v353, %v355
        %v359 = vsel %vm349, 0.0, %v357
        %360 = vst [vmem:[#allocation2] sm:$0xf] %v359
        %361 = vrot.lane.b32.xlu0 %v328, 120
        %v362 = vpop.permute.xlu0 %361
        %363 = vrot.lane.b32.xlu0 %v331, 120
        %v364 = vpop.permute.xlu0 %363
        %vm365 = vcmask 982016
        %v366 = vsel %vm365, %v362, %v364
        %368 = vst [vmem:[#allocation2 + $0x4] sm:$0xf] %v366
        %v369 = vsel %vm347, 1, 0
        %vm370 = vcmp.eq.s32.totalorder %v369, 1
        %371 = vrot.lane.b32.xlu0 %v328, 119
        %v372 = vpop.permute.xlu0 %371
        %373 = vrot.lane.b32.xlu0 %v331, 119
        %v374 = vpop.permute.xlu0 %373
        %vm375 = vcmask 973824
        %v376 = vsel %vm375, %v372, %v374
        %v378 = vsel %vm370, 0.0, %v376
        %379 = vst [vmem:[#allocation2 + $0x8] sm:$0xf] %v378
        %380 = vrot.lane.b32.xlu0 %v328, 105
        %v381 = vpop.permute.xlu0 %380
        %382 = vrot.lane.b32.xlu0 %v331, 105
        %v383 = vpop.permute.xlu0 %382
        %vm384 = vcmask 859136
        %v385 = vsel %vm384, %v381, %v383
        %v387 = vsel %vm349, 0.0, %v385
        %388 = vst [vmem:[#allocation2 + $0xc] sm:$0xf] %v387
        %389 = vrot.lane.b32.xlu0 %v328, 104
        %v390 = vpop.permute.xlu0 %389
        %391 = vrot.lane.b32.xlu0 %v331, 104
        %v392 = vpop.permute.xlu0 %391
        %vm393 = vcmask 850944
        %v394 = vsel %vm393, %v390, %v392
        %396 = vst [vmem:[#allocation2 + $0x10] sm:$0xf] %v394
        %397 = vrot.lane.b32.xlu0 %v328, 103
        %v398 = vpop.permute.xlu0 %397
        %399 = vrot.lane.b32.xlu0 %v331, 103
        %v400 = vpop.permute.xlu0 %399
        %vm401 = vcmask 842752
        %v402 = vsel %vm401, %v398, %v400
        %v404 = vsel %vm370, 0.0, %v402
        %405 = vst [vmem:[#allocation2 + $0x14] sm:$0xf] %v404
        %406 = vrot.lane.b32.xlu0 %v328, 89
        %v407 = vpop.permute.xlu0 %406
        %408 = vrot.lane.b32.xlu0 %v331, 89
        %v409 = vpop.permute.xlu0 %408
        %vm410 = vcmask 728064
        %v411 = vsel %vm410, %v407, %v409
        %v413 = vsel %vm349, 0.0, %v411
        %414 = vst [vmem:[#allocation2 + $0x18] sm:$0xf] %v413
        %415 = vrot.lane.b32.xlu0 %v328, 88
        %v416 = vpop.permute.xlu0 %415
        %417 = vrot.lane.b32.xlu0 %v331, 88
        %v418 = vpop.permute.xlu0 %417
        %vm419 = vcmask 719872
        %v420 = vsel %vm419, %v416, %v418
        %422 = vst [vmem:[#allocation2 + $0x1c] sm:$0xf] %v420
        %423 = vrot.lane.b32.xlu0 %v328, 87
        %v424 = vpop.permute.xlu0 %423
        %425 = vrot.lane.b32.xlu0 %v331, 87
        %v426 = vpop.permute.xlu0 %425
        %vm427 = vcmask 711680
        %v428 = vsel %vm427, %v424, %v426
        %v430 = vsel %vm370, 0.0, %v428
        %431 = vst [vmem:[#allocation2 + $0x20] sm:$0xf] %v430
        %432 = vst [vmem:[#allocation2 + $0x24] sm:$0xf] 0.0
        %v433 = vld [vmem:[#allocation7] sm:$0xff]
        %v434 = vld [vmem:[#allocation7 + $0x8] sm:$0xff]
        %v435 = vld [vmem:[#allocation7 + $0x10] sm:$0xff]
        %v436 = vld [vmem:[#allocation7 + $0x18] sm:$0xff]
        %v437 = vld [vmem:[#allocation2] sm:$0xff]
        %v438 = vld [vmem:[#allocation2 + $0x8] sm:$0xff]
        %v439 = vld [vmem:[#allocation2 + $0x10] sm:$0xff]
        %v440 = vld [vmem:[#allocation2 + $0x18] sm:$0xff]
        %v441 = vld [vmem:[#allocation2 + $0x20] sm:$0xff]
        %v442 = vld [vmem:[%s3] sm:$0xff]
        %v443 = vld [vmem:[%s3 + $0x8] sm:$0xff]
        %v444 = vld [vmem:[%s3 + $0x10] sm:$0xff]
        %v445 = vld [vmem:[%s3 + $0x18] sm:$0xff]
        %447 = vset.pattern.permute.xlu0 0
        %448 = vperm.xlu0 %447, %v442
        %v449 = vpop.permute.xlu0 %448
        %452 = vset.pattern.permute.xlu0 0
        %453 = vperm.xlu0 %452, %v443
        %v454 = vpop.permute.xlu0 %453
        %457 = vset.pattern.permute.xlu0 0
        %458 = vperm.xlu0 %457, %v444
        %v459 = vpop.permute.xlu0 %458
        %462 = vset.pattern.permute.xlu0 0
        %463 = vperm.xlu0 %462, %v445
        %v464 = vpop.permute.xlu0 %463
        %v467 = vsel %vm330, %v433, 0
        %v470 = vsel %vm330, %v434, 0
        %v473 = vsel %vm330, %v435, 0
        %v476 = vsel %vm330, %v436, 0
        %478 = vmatprep.subr.mxu0 0.0
        %479 = vmatpush1.msra.mxu0 %v437
        %480 = vmatprep.subr.mxu0 0.0
        %481 = vmatpush1.msra.mxu0 %v438
        %482 = vmatprep.subr.mxu0 0.0
        %483 = vmatpush1.msra.mxu0 %v439
        %484 = vmatprep.subr.mxu0 0.0
        %485 = vmatpush1.msra.mxu0 %v440
        %486 = vmatprep.subr.mxu0 0.0
        %487 = vmatpush1.msra.mxu0 %v441
        %488 = vmatprep.subr.mxu0 0.0
        %489 = vmatpush1.msra.mxu0 0.0
        %490 = vmatprep.subr.mxu0 0.0
        %491 = vmatpush1.msra.mxu0 0.0
        %492 = vmatprep.subr.mxu0 0.0
        %493 = vmatpush1.msra.mxu0 0.0
        %494 = vmatprep.subr.mxu0 0.0
        %495 = vmatpush1.msra.mxu0 0.0
        %496 = vmatprep.subr.mxu0 0.0
        %497 = vmatpush1.msra.mxu0 0.0
        %498 = vmatprep.subr.mxu0 0.0
        %499 = vmatpush1.msra.mxu0 0.0
        %500 = vmatprep.subr.mxu0 0.0
        %501 = vmatpush1.msra.mxu0 0.0
        %502 = vmatprep.subr.mxu0 0.0
        %503 = vmatpush1.msra.mxu0 0.0
        %504 = vmatprep.subr.mxu0 0.0
        %505 = vmatpush1.msra.mxu0 0.0
        %506 = vmatprep.subr.mxu0 0.0
        %507 = vmatpush1.msra.mxu0 0.0
        %508 = vmatprep.subr.mxu0 0.0
        %509 = vmatpush1.msra.mxu0 0.0
        %510 = vmatprep.subr.mxu0 0.0
        %511 = vmatpush1.msra.mxu0 0.0
        %512 = vmatprep.subr.mxu0 0.0
        %513 = vmatpush1.msra.mxu0 0.0
        %514 = vmatprep.subr.mxu0 0.0
        %515 = vmatpush1.msra.mxu0 0.0
        %516 = vmatprep.subr.mxu0 0.0
        %517 = vmatpush1.msra.mxu0 0.0
        %518 = vmatprep.subr.mxu0 0.0
        %519 = vmatpush1.msra.mxu0 0.0
        %520 = vmatprep.subr.mxu0 0.0
        %521 = vmatpush1.msra.mxu0 0.0
        %522 = vmatprep.subr.mxu0 0.0
        %523 = vmatpush1.msra.mxu0 0.0
        %524 = vmatprep.subr.mxu0 0.0
        %525 = vmatpush1.msra.mxu0 0.0
        %526 = vmatprep.subr.mxu0 0.0
        %527 = vmatpush1.msra.mxu0 0.0
        %528 = vmatprep.subr.mxu0 0.0
        %529 = vmatpush1.msra.mxu0 0.0
        %530 = vmatprep.subr.mxu0 0.0
        %531 = vmatpush1.msra.mxu0 0.0
        %532 = vmatprep.subr.mxu0 0.0
        %533 = vmatpush1.msra.mxu0 0.0
        %534 = vmatprep.subr.mxu0 0.0
        %535 = vmatpush1.msra.mxu0 0.0
        %536 = vmatprep.subr.mxu0 0.0
        %537 = vmatpush1.msra.mxu0 0.0
        %538 = vmatprep.subr.mxu0 0.0
        %539 = vmatpush1.msra.mxu0 0.0
        %540 = vmatprep.subr.mxu0 0.0
        %541 = vmatpush1.msra.mxu0 0.0
        %542 = vmatprep.mubr.f32.mxu0 0.0
        %543 = vmatmul.mubr.f32.gmra.mrb[0].mxu0 %v467
        %v544 = vpop.f32.mrb[0].mxu0
        %v545 = vadd.f32 %v449, %v544
        %v546 = vpop.f32.mrb[0].mxu0
        %547 = vmatprep.mubr.f32.mxu0 0.0
        %548 = vmatmul.mubr.f32.gmra.mrb[0].mxu0 %v470
        %v549 = vpop.f32.mrb[0].mxu0
        %v550 = vadd.f32 %v454, %v549
        %v551 = vpop.f32.mrb[0].mxu0
        %552 = vmatprep.mubr.f32.mxu0 0.0
        %553 = vmatmul.mubr.f32.gmra.mrb[0].mxu0 %v473
        %v554 = vpop.f32.mrb[0].mxu0
        %v555 = vadd.f32 %v459, %v554
        %v556 = vpop.f32.mrb[0].mxu0
        %557 = vmatprep.mubr.f32.mxu0 0.0
        %558 = vmatmul.mubr.f32.gmra.mrb[0].mxu0 %v476
        %v559 = vpop.f32.mrb[0].mxu0
        %v560 = vadd.f32 %v464, %v559
        %v561 = vpop.f32.mrb[0].mxu0
        %562 = vdwg.mxu0
        %v563 = vmax.f32 %v545, 0.0
        %v564 = vmax.f32 %v550, 0.0
        %v565 = vmax.f32 %v555, 0.0
        %v566 = vmax.f32 %v560, 0.0
        %567 = vset.pattern.permute.xlu0 1
        %568 = vperm.xlu0 %567, %v442
        %v569 = vpop.permute.xlu0 %568
        %571 = vset.pattern.permute.xlu0 1
        %572 = vperm.xlu0 %571, %v443
        %v573 = vpop.permute.xlu0 %572
        %575 = vset.pattern.permute.xlu0 1
        %576 = vperm.xlu0 %575, %v444
        %v577 = vpop.permute.xlu0 %576
        %579 = vset.pattern.permute.xlu0 1
        %580 = vperm.xlu0 %579, %v445
        %v581 = vpop.permute.xlu0 %580
        %v583 = vmul.f32 %v563, %v569
        %v584 = vmul.f32 %v564, %v573
        %v585 = vmul.f32 %v565, %v577
        %v586 = vmul.f32 %v566, %v581
        %v587 = vadd.f32 %v583, %v584
        %v588 = vadd.f32 %v587, %v585
        %v589 = vadd.f32 %v588, %v586
        %v590 = vrot.slane %v589, 4
        %v591 = vadd.f32 %v589, %v590
        %v592 = vrot.slane %v591, 2
        %v593 = vadd.f32 %v591, %v592
        %v594 = vrot.slane %v593, 1
        %v595 = vadd.f32 %v593, %v594
        %s596 = sld [smem:[#allocation3]]
        %v597 = vstv %s596
        %v598 = vadd.f32 %v595, %v597
        %v599 = vxor.u32 %v598, 2147483648
        %v600 = vmul.f32 %v599, 1.442695
        %v601 = vpow.pop %v600
        %v602 = vadd.f32 %v601, 1.0
        %v603 = vrcp.pop %v602
        %v604 = vmul.f32 1.0, %v603
        %605 = vst [vmem:[%s298] sm:$0x1] %v604
        %s606 = sand.u32 %s165, 1
        %s607 = scalar_lea.sflag [#allocation6], %s606
        %s608 = sand.u32 %s165, 1
        %s609 = scalar_lea.vmem [#allocation9], %s608
        // Predicated region
        $region49: #{tpu_custom_call.1} parent=39 // pred_check
          %p610 = pneg %p175
        $region50: #{tpu_custom_call.1} parent=39 // pred_check_branch
          %612 = sbr.rel (%p610) target = $region52
        $region51: #{tpu_custom_call.1} parent=39 // pred_region
          %s614 = ssub.s32 16, 16
          %615 = vsyncadd %s607, %s614
          %s616 = smul.addr %s28, 2
          %s617 = sadd.s32 %s29, %s616
          %s618 = smul.addr %s617, 16
          %s619 = scalar_lea.hbm %s5, %s618
          %s621 = sshll.u32 %s609, 4
          %s622 = int_to_ptr.vmem [resolvable:$true] %s621
          %624 = dma.vmem_to_hbm [thread:$0]  %s622, 16, %s619, %s607
        $region52: #{tpu_custom_call.1} parent=39 // pred_fallthru
          _
      $region40: #{tpu_custom_call.1} parent=5 // pred_fallthru
        _
      %p625 = scmp.le.s32.totalorder 2, %s19
      // Predicated region
      $region53: #{tpu_custom_call.1} parent=5 // pred_check
        %p626 = pneg %p625
      $region54: #{tpu_custom_call.1} parent=5 // pred_check_branch
        %628 = sbr.rel (%p626) target = $region56
      $region55: #{tpu_custom_call.1} parent=5 // pred_region
        %s629 = ssub.s32 %s19, 2
        // Predicated region
        $region57: #{tpu_custom_call.1} parent=55 // pred_check
          %p630 = pneg %p181
        $region58: #{tpu_custom_call.1} parent=55 // pred_check_branch
          %632 = sbr.rel (%p630) target = $region60
        $region59: #{tpu_custom_call.1} parent=55 // pred_region
          %s633 = sand.u32 %s166, 1
          %s634 = scalar_lea.sflag [#allocation6], %s633
          %s635 = sand.u32 %s166, 1
          %s636 = scalar_lea.vmem [#allocation9], %s635
          %637 = dma.done %s634, 16
        $region60: #{tpu_custom_call.1} parent=55 // pred_fallthru
          _
      $region56: #{tpu_custom_call.1} parent=5 // pred_fallthru
        _
    $region6: #{tpu_custom_call.1} parent=1 // loop_footer
      %s23 = sadd.s32 1, %s19
    $region7: #{tpu_custom_call.1} parent=1 // loop_footer_branch
      %18 = sbr.rel target = $region3
    $region8: #{tpu_custom_call.1} parent=1 // loop_exit
      _
    %638 = vsyncpa [#allocation5], 1
    %s639 = scalar_lea.sflag [#allocation5], 1
    %640 = vsyncpa %s639, 1
    %641 = vsyncpa [#allocation8], 1
    %642 = vsyncpa [#allocation6], 1
    %s643 = scalar_lea.sflag [#allocation6], 1
    %644 = vsyncpa %s643, 1

</llo_original>
